<compile_context>
chip_gen: v5e
topology: v5e:2x2
jax: 0.10.0
libtpu: 0.0.40
codegen_flags: <defaults>
</compile_context>

<pallas_src>
import jax
import jax.numpy as jnp
from jax.experimental import pallas as pl
from jax.experimental.pallas import tpu as pltpu

_LANE = 128
_MAX_COLS = 4096                      # lane-dense width cap for the flattened view
_TARGET_BLOCK_BYTES = 4 << 20         # ~4 MiB per block; 4x (dbl-buffered in+out) = 16 MiB
_VMEM_LIMIT_BYTES = 32 * 1024 * 1024  # explicit (v5e default is only 16 MiB)


def _linreg_kernel(w_ref, b_ref, x_ref, o_ref):
    # w_ref/b_ref: (1,) scalars in SMEM; x_ref/o_ref: lane-dense VMEM tiles.
    o_ref[...] = w_ref[0] * x_ref[...] + b_ref[0]


def _plan_tiling(n_rows, cols, itemsize):
    """Pick (tile_rows, rows_padded) honoring sublane packing and VMEM budget."""
    sub = {4: 8, 2: 16, 1: 32}.get(itemsize, 8)   # f32 / bf16 / int8-fp8 sublane minimum
    t = max(1, _TARGET_BLOCK_BYTES // (cols * itemsize))
    total_bytes = n_rows * cols * itemsize
    if t >= n_rows:
        # Whole array fits in one block.  For non-tiny inputs split in two so the
        # grid axis can shard across v7x's 2 TensorCores; for tiny inputs a single
        # block avoids all per-step pipeline overhead.
        if total_bytes >= (1 << 20) and n_rows >= 2 * sub:
            t = pl.cdiv(pl.cdiv(n_rows, 2), sub) * sub
        else:
            return n_rows, n_rows
    else:
        t = max(sub, (t // sub) * sub)
    rows_padded = pl.cdiv(n_rows, t) * t
    return t, rows_padded


def linear_regression_forward(x, weight, bias):
    """y = weight * x + bias (elementwise), scalar weight/bias of shape (1,)."""
    orig_shape = x.shape
    n = x.size
    itemsize = jnp.dtype(x.dtype).itemsize

    # Lane-dense flattened view: last dim is a large multiple of 128.
    cols = min(_MAX_COLS, pl.cdiv(n, _LANE) * _LANE)
    rows = pl.cdiv(n, cols)
    tile_rows, rows_padded = _plan_tiling(rows, cols, itemsize)
    padded_n = rows_padded * cols

    x_flat = x.reshape(-1)
    if padded_n != n:
        x_flat = jnp.pad(x_flat, (0, padded_n - n))
    x2d = x_flat.reshape(rows_padded, cols)

    grid = (rows_padded // tile_rows,)

    y2d = pl.pallas_call(
        _linreg_kernel,
        out_shape=jax.ShapeDtypeStruct((rows_padded, cols), x.dtype),
        grid_spec=pltpu.PrefetchScalarGridSpec(
            num_scalar_prefetch=0,
            grid=grid,
            in_specs=[
                pl.BlockSpec(memory_space=pltpu.SMEM),                # weight (1,)
                pl.BlockSpec(memory_space=pltpu.SMEM),                # bias   (1,)
                pl.BlockSpec((tile_rows, cols), lambda i: (i, 0)),    # x tile
            ],
            out_specs=pl.BlockSpec((tile_rows, cols), lambda i: (i, 0)),
        ),
        compiler_params=pltpu.CompilerParams(
            dimension_semantics=("parallel",),
            vmem_limit_bytes=_VMEM_LIMIT_BYTES,
        ),
    )(weight, bias, x2d)

    y = y2d.reshape(-1)
    if padded_n != n:
        y = y[:n]
    return y.reshape(orig_shape)


if __name__ == "__main__":
    key = jax.random.PRNGKey(0)
    k_w, k_b, k_x1, k_x2 = jax.random.split(key, 4)

    # Deterministic parameter init (matches torch.randn(1) shapes).
    weight = jax.random.normal(k_w, (1,), dtype=jnp.float32)
    bias = jax.random.normal(k_b, (1,), dtype=jnp.float32)

    # Small input consistent with an elementwise forward: [16, 128] float32.
    x1 = jax.random.normal(k_x1, (16, 128), dtype=jnp.float32)
    y1 = jax.block_until_ready(linear_regression_forward(x1, weight, bias))
    assert jnp.allclose(y1, weight[0] * x1 + bias[0], atol=1e-6), "mismatch (x1)"

    # Non-divisible / arbitrary shape exercises the lane-dense flatten + pad path.
    x2 = jax.random.normal(k_x2, (33, 200), dtype=jnp.float32)
    y2 = jax.block_until_ready(linear_regression_forward(x2, weight, bias))
    assert jnp.allclose(y2, weight[0] * x2 + bias[0], atol=1e-6), "mismatch (x2)"

    print("KERNEL_OK")
</pallas_src>

<mosaic_0001>
module attributes {stable_mosaic.version = 11 : i64} {
  func.func @_linreg_kernel(%arg0: i32, %arg1: memref<1xf32, #tpu.memory_space<smem>>, %arg2: memref<1xf32, #tpu.memory_space<smem>>, %arg3: memref<1x2048xf32, #tpu.memory_space<vmem>>, %arg4: memref<1x2048xf32, #tpu.memory_space<vmem>>) attributes {dimension_semantics = [#tpu.dimension_semantics<parallel>], iteration_bounds = array<i64: 1>, scalar_prefetch = 0 : i64, scratch_operands = 0 : i64, tpu.core_type = #tpu.core_type<tc>, window_params = [{transform_indices = @transform_0, window_bounds = array<i64: 1>}, {transform_indices = @transform_1, window_bounds = array<i64: 1>}, {transform_indices = @transform_2, window_bounds = array<i64: 1, 2048>}, {transform_indices = @transform_3, window_bounds = array<i64: 1, 2048>}]} {
    %c0 = arith.constant 0 : index
    %0 = memref.load %arg1[%c0] : memref<1xf32, #tpu.memory_space<smem>>
    %c0_0 = arith.constant 0 : index
    %c0_1 = arith.constant 0 : index
    %1 = vector.load %arg3[%c0_0, %c0_1] : memref<1x2048xf32, #tpu.memory_space<vmem>>, vector<1x2048xf32>
    %2 = vector.broadcast %0 : f32 to vector<1x2048xf32>
    %3 = arith.mulf %2, %1 : vector<1x2048xf32>
    %c0_2 = arith.constant 0 : index
    %4 = memref.load %arg2[%c0_2] : memref<1xf32, #tpu.memory_space<smem>>
    %5 = vector.broadcast %4 : f32 to vector<1x2048xf32>
    %6 = arith.addf %3, %5 : vector<1x2048xf32>
    %c0_3 = arith.constant 0 : index
    %c0_4 = arith.constant 0 : index
    %7 = vector.load %arg4[%c0_3, %c0_4] : memref<1x2048xf32, #tpu.memory_space<vmem>>, vector<1x2048xf32>
    tpu.vector_store %arg4[%c0_3, %c0_4], %6 {strides = array<i32>} : memref<1x2048xf32, #tpu.memory_space<vmem>>, vector<1x2048xf32>,
    return
  }
  func.func @transform_0(%arg0: i32) -> i32 {
    %c0_i32 = arith.constant 0 : i32
    %c0_i32_0 = arith.constant 0 : i32
    return %c0_i32 : i32
  }
  func.func @transform_1(%arg0: i32) -> i32 {
    %c0_i32 = arith.constant 0 : i32
    %c0_i32_0 = arith.constant 0 : i32
    return %c0_i32 : i32
  }
  func.func @transform_2(%arg0: i32) -> (i32, i32) {
    %c0_i32 = arith.constant 0 : i32
    %c0_i32_0 = arith.constant 0 : i32
    return %arg0, %c0_i32 : i32, i32
  }
  func.func @transform_3(%arg0: i32) -> (i32, i32) {
    %c0_i32 = arith.constant 0 : i32
    %c0_i32_0 = arith.constant 0 : i32
    return %arg0, %c0_i32 : i32, i32
  }
}

</mosaic_0001>

<llo_original>
// kernel: tpu_custom_call.1
$region0: #{tpu_custom_call.1}
  #allocation0 [shape = 'u32[]', space=smem, size = 0x4, offset = 0x4, fixed_abs, tag = 'smem constant byte address 0x4 - core index']
  #allocation1 [shape = 'u32[72,128]{1,0:T(1,128)}', space=vmem, size = 0x9000, scoped, tag = 'internal scratch']
  #allocation2 [shape = 'f32[1]{0:T(128)S(6)}', space=smem, size = 0x200, scoped, tag = 'scoped memory for tpu_custom_call.1']
  #allocation3 [shape = 'f32[1]{0:T(128)S(6)}', space=smem, size = 0x200, scoped, tag = 'scoped memory for tpu_custom_call.1']
  %s0 = inlined_call_operand.<no memory space> [shape: f32[1], index: 0, kind: input, shape index: {}]
  %s1 = inlined_call_operand.<no memory space> [shape: f32[1], index: 1, kind: input, shape index: {}]
  %s2 = inlined_call_operand.hbm [shape: f32[1,2048], index: 2, kind: input, shape index: {}]
  %s3 = inlined_call_operand.hbm [shape: f32[1,2048], index: 3, kind: output, shape index: {}]
  %s4 = sld [smem:[#allocation0]]
  $region26: #{tpu_custom_call.1} parent=0
    _
  %s6 = ssub.s32 1, %s4
  %s7 = scalar_select 0, %s6, %s4
  %8 = sst [smem:[#allocation2]] %s0
  %9 = sst [smem:[#allocation3]] %s1
  $region1: #{tpu_custom_call.1} parent=0
    #allocation4 [shape = 'u8[8192]{0}', space=vmem, size = 0x2000, scoped, tag = 'input window, operand 2, single buffered']
    #allocation5 [shape = 's32[1]{0}', space=sflag, size = 0x4, scoped, tag = 'scoped memory for tpu_custom_call.1']
    #allocation6 [shape = 's32[1]{0}', space=sflag, size = 0x4, scoped, tag = 'scoped memory for tpu_custom_call.1']
    #allocation7 [shape = 'u8[8192]{0}', space=vmem, size = 0x2000, scoped, tag = 'output window, operand 0, single buffered']
    %10 = vsyncpa [#allocation5], 0
    %11 = vsyncpa [#allocation6], 0
    // Predicated region
    $region2: #{tpu_custom_call.1} parent=1 // pred_check
      _
    $region3: #{tpu_custom_call.1} parent=1 // pred_check_branch
      %13 = sbr.rel (0) target = $region5
    $region4: #{tpu_custom_call.1} parent=1 // pred_region
      _
    $region5: #{tpu_custom_call.1} parent=1 // pred_fallthru
      _
    // Predicated region
    $region6: #{tpu_custom_call.1} parent=1 // pred_check
      _
    $region7: #{tpu_custom_call.1} parent=1 // pred_check_branch
      %15 = sbr.rel (0) target = $region9
    $region8: #{tpu_custom_call.1} parent=1 // pred_region
      _
    $region9: #{tpu_custom_call.1} parent=1 // pred_fallthru
      _
    // Predicated region
    $region10: #{tpu_custom_call.1} parent=1 // pred_check
      _
    $region11: #{tpu_custom_call.1} parent=1 // pred_check_branch
      %17 = sbr.rel (0) target = $region13
    $region12: #{tpu_custom_call.1} parent=1 // pred_region
      %19 = vsyncadd [#allocation5], 0
      %s21 = sshll.u32 %s2, 4
      %s22 = int_to_ptr.hbm [resolvable:$true] %s21
      %s23 = sshll.u32 [#allocation4], 4
      %s24 = int_to_ptr.vmem [resolvable:$true] %s23
      %26 = dma.hbm_to_vmem [thread:$0]  %s22, 256, %s24, [#allocation5]
    $region13: #{tpu_custom_call.1} parent=1 // pred_fallthru
      _
    // Predicated region
    $region14: #{tpu_custom_call.1} parent=1 // pred_check
      _
    $region15: #{tpu_custom_call.1} parent=1 // pred_check_branch
      %28 = sbr.rel (0) target = $region17
    $region16: #{tpu_custom_call.1} parent=1 // pred_region
      %30 = dma.done [#allocation5], 256
    $region17: #{tpu_custom_call.1} parent=1 // pred_fallthru
      _
    %s31 = sld [smem:[#allocation2]]
    %v32 = vld [vmem:[#allocation4] sm:$0xff]
    %v33 = vld [vmem:[#allocation4 + $0x8] sm:$0xff]
    %v34 = vstv %s31
    %v35 = vmul.f32 %v34, %v32
    %v36 = vmul.f32 %v34, %v33
    %s37 = sld [smem:[#allocation3]]
    %v38 = vstv %s37
    %v39 = vadd.f32 %v35, %v38
    %v40 = vadd.f32 %v36, %v38
    %41 = vst [vmem:[#allocation7] sm:$0xff] %v39
    %42 = vst [vmem:[#allocation7 + $0x8] sm:$0xff] %v40
    // Predicated region
    $region18: #{tpu_custom_call.1} parent=1 // pred_check
      _
    $region19: #{tpu_custom_call.1} parent=1 // pred_check_branch
      %44 = sbr.rel (0) target = $region21
    $region20: #{tpu_custom_call.1} parent=1 // pred_region
      %46 = vsyncadd [#allocation6], 0
      %s48 = sshll.u32 [#allocation7], 4
      %s49 = int_to_ptr.vmem [resolvable:$true] %s48
      %s50 = sshll.u32 %s3, 4
      %s51 = int_to_ptr.hbm [resolvable:$true] %s50
      %53 = dma.vmem_to_hbm [thread:$0]  %s49, 256, %s51, [#allocation6]
    $region21: #{tpu_custom_call.1} parent=1 // pred_fallthru
      _
    // Predicated region
    $region22: #{tpu_custom_call.1} parent=1 // pred_check
      _
    $region23: #{tpu_custom_call.1} parent=1 // pred_check_branch
      %55 = sbr.rel (0) target = $region25
    $region24: #{tpu_custom_call.1} parent=1 // pred_region
      %57 = dma.done [#allocation6], 256
    $region25: #{tpu_custom_call.1} parent=1 // pred_fallthru
      _
    %58 = vsyncpa [#allocation5], 1
    %59 = vsyncpa [#allocation6], 1

</llo_original>
